<compile_context>
chip_gen: v6e
topology: v6e:2x2x1
jax: 0.10.0
libtpu: 0.0.40
codegen_flags: <defaults>
</compile_context>

<pallas_src>
import math

import jax
import jax.numpy as jnp
from jax.experimental import pallas as pl
from jax.experimental.pallas import tpu as pltpu


def _pad_to(n, m):
    return ((n + m - 1) // m) * m


def _sublane_mult(itemsize):
    # native sublane packing: 8 rows f32, 16 bf16/f16, 32 int8/fp8
    return max(8, 32 // max(int(itemsize), 1))


def _device_budget():
    """(per-block VMEM budget bytes, scoped vmem limit bytes) per TPU gen."""
    kind = ""
    try:
        kind = jax.devices()[0].device_kind.lower()
    except Exception:
        pass
    if "v5 lite" in kind or "v5e" in kind or "v5lite" in kind:
        return 3 << 20, 28 << 20   # v5e: 128 MiB physical, small scoped default
    if "v6" in kind:
        return 6 << 20, 64 << 20   # v6e: big tiles amortize the ~0.35us/step cost
    if "v7" in kind:
        return 4 << 20, 44 << 20   # v7x: only 64 MiB physical VMEM -> headroom
    return 4 << 20, 40 << 20       # unknown (v4/v5p/...): conservative


def _pick_sublane_tile(dim, mult, cap):
    """Tile for a dim that lands on a sublane (second-to-last) axis of some
    block: result is either == dim (always legal) or a multiple of `mult`.
    Prefers divisors of `dim`; otherwise relies on a cdiv grid (partial tail)."""
    cap = max(1, cap)
    if dim <= cap or dim <= mult:
        return dim
    best = 0
    d = mult
    while d <= cap:
        if dim % d == 0:
            best = d
        d += mult
    if best:
        return best
    return max(mult, (cap // mult) * mult)


def _pick_lane_tile(dim, cap):
    """Tile for a dim that lands on the lane (last) axis of some block:
    result is either == dim or a multiple of 128."""
    cap = max(1, cap)
    if dim <= cap:
        return dim
    return max(128, (cap // 128) * 128)


def _pick_lead_tile(dim, cap):
    """Leading (batch) dims have no alignment constraint; prefer a divisor."""
    cap = max(1, min(dim, cap))
    for d in range(cap, 0, -1):
        if dim % d == 0:
            return d
    return 1


def _swap12_kernel(x_ref, o_ref):
    # tile (tl, ta, tb, tt) -> (tl, tb, ta, tt); lane dim untouched (XLU/copy)
    o_ref[...] = jnp.swapaxes(x_ref[...], 1, 2)


def _swap13_kernel(x_ref, o_ref):
    # tile (tl, ta, tm, tt) -> (tl, tt, tm, ta); true minor-dim transpose
    o_ref[...] = jnp.swapaxes(x_ref[...], 1, 3)


def swapaxes_net(x, dim1, dim2):
    """Pallas implementation of swapaxesNet(dim1, dim2).forward(x)."""
    ndim = x.ndim
    if ndim == 0:
        return x
    d1 = dim1 % ndim
    d2 = dim2 % ndim
    if d1 == d2:
        return x                     # identity: true no-op, zero HBM traffic
    if d1 > d2:
        d1, d2 = d2, d1

    shape = x.shape
    out_shape = list(shape)
    out_shape[d1], out_shape[d2] = out_shape[d2], out_shape[d1]
    out_shape = tuple(out_shape)

    isz = jnp.dtype(x.dtype).itemsize
    mult = _sublane_mult(isz)
    budget, vmem_limit = _device_budget()
    cost = pl.CostEstimate(flops=0, transcendentals=0,
                           bytes_accessed=2 * x.size * isz)

    lead = math.prod(shape[:d1]) if d1 > 0 else 1
    a = shape[d1]                                    # first swapped dim
    mid = math.prod(shape[d1 + 1:d2]) if d2 > d1 + 1 else 1
    b = shape[d2]                                    # second swapped dim

    # ------------------------------------------------------------------ #
    # Hot path: the swap does not touch the lane (last) axis.
    # View: [L, A, M, B, T] -> [L, B, M, A, T]; M squeezed, everything tiled.
    # ------------------------------------------------------------------ #
    if d2 < ndim - 1:
        t = math.prod(shape[d2 + 1:])                # trailing lane group
        # Tile T so that even a minimal (mult x mult) row block fits budget.
        tt = _pick_lane_tile(t, max(128, budget // (mult * mult * isz)))
        unit = _pad_to(tt, 128) * isz                # padded bytes per row
        cap = max(1, budget // unit)                 # budget in sublane rows
        r = max(mult, (math.isqrt(cap) // mult) * mult)
        ta = _pick_sublane_tile(a, mult, r)
        tb = _pick_sublane_tile(b, mult, r)
        pa, pb = _pad_to(ta, mult), _pad_to(tb, mult)
        if pa < r:                                   # small A: spend rest on B
            tb = _pick_sublane_tile(b, mult, max(tb, cap // max(pa, 1)))
        elif pb < r:                                 # small B: spend rest on A
            ta = _pick_sublane_tile(a, mult, max(ta, cap // max(pb, 1)))
        # Padded footprint of the larger of the in/out blocks (tl = 1).
        blk = max(ta * _pad_to(tb, mult), tb * _pad_to(ta, mult)) * unit
        tl = _pick_lead_tile(lead, budget // max(blk, 1))

        x_v = x.reshape(lead, a, mid, b, t)
        # b-tile axis first (likely extent >= 2) for an even megacore split.
        grid = (pl.cdiv(b, tb), pl.cdiv(lead, tl), pl.cdiv(a, ta),
                mid, pl.cdiv(t, tt))
        in_spec = pl.BlockSpec((tl, ta, None, tb, tt),
                               lambda j, l, i, m, k: (l, i, m, j, k))
        out_spec = pl.BlockSpec((tl, tb, None, ta, tt),
                                lambda j, l, i, m, k: (l, j, m, i, k))

        out_v = pl.pallas_call(
            _swap12_kernel,
            out_shape=jax.ShapeDtypeStruct((lead, b, mid, a, t), x.dtype),
            grid=grid,
            in_specs=[in_spec],
            out_specs=out_spec,
            compiler_params=pltpu.CompilerParams(
                dimension_semantics=("parallel",) * len(grid),
                vmem_limit_bytes=vmem_limit),
            cost_estimate=cost,
        )(x_v)
        return out_v.reshape(out_shape)

    # ------------------------------------------------------------------ #
    # Fallback: swap involves the last (lane) axis -> in-tile minor
    # transpose. View: [L, A, M, T] -> [L, T, M, A]; all dims tiled.
    # ------------------------------------------------------------------ #
    t = shape[d2]
    lane_cap = 256                                   # keeps minimal block ~2 MiB
    tt = _pick_lane_tile(t, lane_cap)
    ta = _pick_lane_tile(a, lane_cap)
    row_cost = max(ta * _pad_to(tt, 128), tt * _pad_to(ta, 128)) * isz
    tm = _pick_sublane_tile(mid, mult, budget // max(row_cost, 1))
    blk = _pad_to(tm, mult) * row_cost
    tl = _pick_lead_tile(lead, budget // max(blk, 1))

    x_v = x.reshape(lead, a, mid, t)
    grid = (pl.cdiv(t, tt), pl.cdiv(lead, tl), pl.cdiv(a, ta), pl.cdiv(mid, tm))
    out_v = pl.pallas_call(
        _swap13_kernel,
        out_shape=jax.ShapeDtypeStruct((lead, t, mid, a), x.dtype),
        grid=grid,
        in_specs=[pl.BlockSpec((tl, ta, tm, tt),
                               lambda k, l, i, m: (l, i, m, k))],
        out_specs=pl.BlockSpec((tl, tt, tm, ta),
                               lambda k, l, i, m: (l, k, m, i)),
        compiler_params=pltpu.CompilerParams(
            dimension_semantics=("parallel",) * len(grid),
            vmem_limit_bytes=vmem_limit),
        cost_estimate=cost,
    )(x_v)
    return out_v.reshape(out_shape)


if __name__ == "__main__":
    # swapaxesNet(dim1=1, dim2=2) applied to an NCHW tensor.
    dim1, dim2 = 1, 2
    key = jax.random.PRNGKey(0)
    x = jax.random.normal(key, (2, 4, 16, 16), dtype=jnp.float32)

    out = swapaxes_net(x, dim1, dim2)
    out = jax.block_until_ready(out)

    ref = jnp.swapaxes(x, dim1, dim2)
    assert out.shape == ref.shape, (out.shape, ref.shape)
    assert out.dtype == ref.dtype, (out.dtype, ref.dtype)
    assert bool(jnp.array_equal(out, ref)), "mismatch vs jnp.swapaxes reference"

    print("KERNEL_OK")
</pallas_src>

<mosaic_0001>
module attributes {stable_mosaic.version = 11 : i64} {
  func.func @_swap12_kernel(%arg0: i32, %arg1: i32, %arg2: i32, %arg3: i32, %arg4: i32, %arg5: memref<2x4x1x16x16xf32, #tpu.memory_space<vmem>>, %arg6: memref<2x16x1x4x16xf32, #tpu.memory_space<vmem>>) attributes {dimension_semantics = [#tpu.dimension_semantics<parallel>, #tpu.dimension_semantics<parallel>, #tpu.dimension_semantics<parallel>, #tpu.dimension_semantics<parallel>, #tpu.dimension_semantics<parallel>], iteration_bounds = array<i64: 1, 1, 1, 1, 1>, scalar_prefetch = 0 : i64, scratch_operands = 0 : i64, tpu.core_type = #tpu.core_type<tc>, window_params = [{transform_indices = @transform_0, window_bounds = array<i64: 2, 4, 1, 16, 16>}, {transform_indices = @transform_1, window_bounds = array<i64: 2, 16, 1, 4, 16>}]} {
    %c0 = arith.constant 0 : index
    %c0_0 = arith.constant 0 : index
    %c0_1 = arith.constant 0 : index
    %c0_2 = arith.constant 0 : index
    %c0_3 = arith.constant 0 : index
    %0 = vector.load %arg5[%c0, %c0_0, %c0_1, %c0_2, %c0_3] : memref<2x4x1x16x16xf32, #tpu.memory_space<vmem>>, vector<2x4x1x16x16xf32>
    %1 = vector.shape_cast %0 : vector<2x4x1x16x16xf32> to vector<2x4x16x16xf32>
    %2 = tpu.transpose %1, [0, 2, 1, 3] : vector<2x4x16x16xf32> -> vector<2x16x4x16xf32>
    %c0_4 = arith.constant 0 : index
    %c0_5 = arith.constant 0 : index
    %c0_6 = arith.constant 0 : index
    %c0_7 = arith.constant 0 : index
    %c0_8 = arith.constant 0 : index
    %3 = vector.load %arg6[%c0_4, %c0_5, %c0_6, %c0_7, %c0_8] : memref<2x16x1x4x16xf32, #tpu.memory_space<vmem>>, vector<2x16x1x4x16xf32>
    %4 = vector.shape_cast %3 : vector<2x16x1x4x16xf32> to vector<2x16x4x16xf32>
    %5 = vector.shape_cast %2 : vector<2x16x4x16xf32> to vector<2x16x1x4x16xf32>
    tpu.vector_store %arg6[%c0_4, %c0_5, %c0_6, %c0_7, %c0_8], %5 {strides = array<i32>} : memref<2x16x1x4x16xf32, #tpu.memory_space<vmem>>, vector<2x16x1x4x16xf32>,
    return
  }
  func.func @transform_0(%arg0: i32, %arg1: i32, %arg2: i32, %arg3: i32, %arg4: i32) -> (i32, i32, i32, i32, i32) {
    %c0_i32 = arith.constant 0 : i32
    return %arg1, %arg2, %arg3, %arg0, %arg4 : i32, i32, i32, i32, i32
  }
  func.func @transform_1(%arg0: i32, %arg1: i32, %arg2: i32, %arg3: i32, %arg4: i32) -> (i32, i32, i32, i32, i32) {
    %c0_i32 = arith.constant 0 : i32
    return %arg1, %arg0, %arg3, %arg2, %arg4 : i32, i32, i32, i32, i32
  }
}

</mosaic_0001>

<llo_original>
// kernel: tpu_custom_call.1
$region0: #{tpu_custom_call.1}
  #allocation0 [shape = 'u32[]', space=smem, size = 0x4, offset = 0x4, fixed_abs, tag = 'smem constant byte address 0x4 - core index']
  #allocation1 [shape = 'u32[144,128]{1,0:T(1,128)}', space=vmem, size = 0x12000, scoped, tag = 'internal scratch']
  %s0 = inlined_call_operand.hbm [shape: f32[2,4,1,16,16], index: 0, kind: input, shape index: {}]
  %s1 = inlined_call_operand.hbm [shape: f32[2,16,1,4,16], index: 1, kind: output, shape index: {}]
  %s2 = sld [smem:[#allocation0]]
  $region18: #{tpu_custom_call.1} parent=0
    _
  %s4 = ssub.s32 1, %s2
  %s5 = scalar_select 0, %s4, %s2
  $region1: #{tpu_custom_call.1} parent=0
    #allocation2 [shape = 'u8[65536]{0}', space=vmem, size = 0x10000, scoped, tag = 'input window, operand 0, single buffered']
    #allocation3 [shape = 's32[1]{0}', space=sflag, size = 0x4, scoped, tag = 'scoped memory for tpu_custom_call.1']
    #allocation4 [shape = 's32[1]{0}', space=sflag, size = 0x4, scoped, tag = 'scoped memory for tpu_custom_call.1']
    #allocation5 [shape = 'u8[65536]{0}', space=vmem, size = 0x10000, scoped, tag = 'output window, operand 0, single buffered']
    %6 = vsyncpa [#allocation3], 0
    %7 = vsyncpa [#allocation4], 0
    // Predicated region
    $region2: #{tpu_custom_call.1} parent=1 // pred_check
      _
    $region3: #{tpu_custom_call.1} parent=1 // pred_check_branch
      %9 = sbr.rel (0) target = $region5
    $region4: #{tpu_custom_call.1} parent=1 // pred_region
      %s11 = ssub.s32 2048, 2048
      %12 = vsyncadd [#allocation3], %s11
      %s13 = sshll.u32 [#allocation2], 4
      %s14 = int_to_ptr.vmem [resolvable:$true] %s13
      %19 = dma.hbm_to_vmem [thread:$0]  %s0, 2048, %s14, [#allocation3], 128, 128, 8
    $region5: #{tpu_custom_call.1} parent=1 // pred_fallthru
      _
    // Predicated region
    $region6: #{tpu_custom_call.1} parent=1 // pred_check
      _
    $region7: #{tpu_custom_call.1} parent=1 // pred_check_branch
      %21 = sbr.rel (0) target = $region9
    $region8: #{tpu_custom_call.1} parent=1 // pred_region
      %22 = dma.done [#allocation3], 2048
    $region9: #{tpu_custom_call.1} parent=1 // pred_fallthru
      _
    %v23 = vld [vmem:[#allocation2] sm:$0xff]
    %v24 = vld [vmem:[#allocation2 + $0x8] sm:$0xff]
    %v25 = vld [vmem:[#allocation2 + $0x10] sm:$0xff]
    %v26 = vld [vmem:[#allocation2 + $0x18] sm:$0xff]
    %v27 = vld [vmem:[#allocation2 + $0x20] sm:$0xff]
    %v28 = vld [vmem:[#allocation2 + $0x28] sm:$0xff]
    %v29 = vld [vmem:[#allocation2 + $0x30] sm:$0xff]
    %v30 = vld [vmem:[#allocation2 + $0x38] sm:$0xff]
    %v31 = vld [vmem:[#allocation2 + $0x40] sm:$0xff]
    %v32 = vld [vmem:[#allocation2 + $0x48] sm:$0xff]
    %v33 = vld [vmem:[#allocation2 + $0x50] sm:$0xff]
    %v34 = vld [vmem:[#allocation2 + $0x58] sm:$0xff]
    %v35 = vld [vmem:[#allocation2 + $0x60] sm:$0xff]
    %v36 = vld [vmem:[#allocation2 + $0x68] sm:$0xff]
    %v37 = vld [vmem:[#allocation2 + $0x70] sm:$0xff]
    %v38 = vld [vmem:[#allocation2 + $0x78] sm:$0xff]
    %v39 = vcombine.low %v23, %v27
    %v40 = vcombine.high %v23, %v27
    %v42 = vunpack.c.l.s4 1983009808
    %v43 = vunpack.c.0.s8 %v42
    %v44 = vlaneseq
    %v45 = vshrl.u32 %v44, 7
    %v46 = vsub.s32 %v43, %v45
    %v47 = vrot.slane %v39, %v46
    %v49 = vunpack.c.l.s4 1983009808
    %v50 = vunpack.c.0.s8 %v49
    %v51 = vlaneseq
    %v52 = vshrl.u32 %v51, 7
    %v53 = vsub.s32 %v50, %v52
    %v54 = vrot.slane %v40, %v53
    %v55 = vcombine.low %v25, %v29
    %v56 = vcombine.high %v25, %v29
    %v58 = vunpack.c.l.s4 1983009808
    %v59 = vunpack.c.0.s8 %v58
    %v60 = vlaneseq
    %v61 = vshrl.u32 %v60, 7
    %v62 = vsub.s32 %v59, %v61
    %v63 = vrot.slane %v55, %v62
    %v65 = vunpack.c.l.s4 1983009808
    %v66 = vunpack.c.0.s8 %v65
    %v67 = vlaneseq
    %v68 = vshrl.u32 %v67, 7
    %v69 = vsub.s32 %v66, %v68
    %v70 = vrot.slane %v56, %v69
    %v71 = vcombine.low %v47, %v63
    %v72 = vcombine.high %v47, %v63
    %v74 = vunpack.c.l.s4 1934713408
    %v75 = vunpack.c.0.s8 %v74
    %v76 = vlaneseq
    %v77 = vshrl.u32 %v76, 7
    %v78 = vsub.s32 %v75, %v77
    %v79 = vrot.slane %v71, %v78
    %v81 = vunpack.c.l.s4 1934713408
    %v82 = vunpack.c.0.s8 %v81
    %v83 = vlaneseq
    %v84 = vshrl.u32 %v83, 7
    %v85 = vsub.s32 %v82, %v84
    %v86 = vrot.slane %v72, %v85
    %v87 = vcombine.low %v54, %v70
    %v88 = vcombine.high %v54, %v70
    %v90 = vunpack.c.l.s4 1934713408
    %v91 = vunpack.c.0.s8 %v90
    %v92 = vlaneseq
    %v93 = vshrl.u32 %v92, 7
    %v94 = vsub.s32 %v91, %v93
    %v95 = vrot.slane %v87, %v94
    %v97 = vunpack.c.l.s4 1934713408
    %v98 = vunpack.c.0.s8 %v97
    %v99 = vlaneseq
    %v100 = vshrl.u32 %v99, 7
    %v101 = vsub.s32 %v98, %v100
    %v102 = vrot.slane %v88, %v101
    %v103 = vcombine.high %v79, 0.0
    %v104 = vcombine.high %v86, 0.0
    %v105 = vcombine.high %v95, 0.0
    %v106 = vcombine.high %v102, 0.0
    %v107 = vcombine.low %v24, %v28
    %v108 = vcombine.high %v24, %v28
    %v110 = vunpack.c.l.s4 1983009808
    %v111 = vunpack.c.0.s8 %v110
    %v112 = vlaneseq
    %v113 = vshrl.u32 %v112, 7
    %v114 = vsub.s32 %v111, %v113
    %v115 = vrot.slane %v107, %v114
    %v117 = vunpack.c.l.s4 1983009808
    %v118 = vunpack.c.0.s8 %v117
    %v119 = vlaneseq
    %v120 = vshrl.u32 %v119, 7
    %v121 = vsub.s32 %v118, %v120
    %v122 = vrot.slane %v108, %v121
    %v123 = vcombine.low %v26, %v30
    %v124 = vcombine.high %v26, %v30
    %v126 = vunpack.c.l.s4 1983009808
    %v127 = vunpack.c.0.s8 %v126
    %v128 = vlaneseq
    %v129 = vshrl.u32 %v128, 7
    %v130 = vsub.s32 %v127, %v129
    %v131 = vrot.slane %v123, %v130
    %v133 = vunpack.c.l.s4 1983009808
    %v134 = vunpack.c.0.s8 %v133
    %v135 = vlaneseq
    %v136 = vshrl.u32 %v135, 7
    %v137 = vsub.s32 %v134, %v136
    %v138 = vrot.slane %v124, %v137
    %v139 = vcombine.low %v115, %v131
    %v140 = vcombine.high %v115, %v131
    %v142 = vunpack.c.l.s4 1934713408
    %v143 = vunpack.c.0.s8 %v142
    %v144 = vlaneseq
    %v145 = vshrl.u32 %v144, 7
    %v146 = vsub.s32 %v143, %v145
    %v147 = vrot.slane %v139, %v146
    %v149 = vunpack.c.l.s4 1934713408
    %v150 = vunpack.c.0.s8 %v149
    %v151 = vlaneseq
    %v152 = vshrl.u32 %v151, 7
    %v153 = vsub.s32 %v150, %v152
    %v154 = vrot.slane %v140, %v153
    %v155 = vcombine.low %v122, %v138
    %v156 = vcombine.high %v122, %v138
    %v158 = vunpack.c.l.s4 1934713408
    %v159 = vunpack.c.0.s8 %v158
    %v160 = vlaneseq
    %v161 = vshrl.u32 %v160, 7
    %v162 = vsub.s32 %v159, %v161
    %v163 = vrot.slane %v155, %v162
    %v165 = vunpack.c.l.s4 1934713408
    %v166 = vunpack.c.0.s8 %v165
    %v167 = vlaneseq
    %v168 = vshrl.u32 %v167, 7
    %v169 = vsub.s32 %v166, %v168
    %v170 = vrot.slane %v156, %v169
    %v171 = vcombine.high %v147, 0.0
    %v172 = vcombine.high %v154, 0.0
    %v173 = vcombine.high %v163, 0.0
    %v174 = vcombine.high %v170, 0.0
    %v175 = vcombine.low %v31, %v35
    %v176 = vcombine.high %v31, %v35
    %v178 = vunpack.c.l.s4 1983009808
    %v179 = vunpack.c.0.s8 %v178
    %v180 = vlaneseq
    %v181 = vshrl.u32 %v180, 7
    %v182 = vsub.s32 %v179, %v181
    %v183 = vrot.slane %v175, %v182
    %v185 = vunpack.c.l.s4 1983009808
    %v186 = vunpack.c.0.s8 %v185
    %v187 = vlaneseq
    %v188 = vshrl.u32 %v187, 7
    %v189 = vsub.s32 %v186, %v188
    %v190 = vrot.slane %v176, %v189
    %v191 = vcombine.low %v33, %v37
    %v192 = vcombine.high %v33, %v37
    %v194 = vunpack.c.l.s4 1983009808
    %v195 = vunpack.c.0.s8 %v194
    %v196 = vlaneseq
    %v197 = vshrl.u32 %v196, 7
    %v198 = vsub.s32 %v195, %v197
    %v199 = vrot.slane %v191, %v198
    %v201 = vunpack.c.l.s4 1983009808
    %v202 = vunpack.c.0.s8 %v201
    %v203 = vlaneseq
    %v204 = vshrl.u32 %v203, 7
    %v205 = vsub.s32 %v202, %v204
    %v206 = vrot.slane %v192, %v205
    %v207 = vcombine.low %v183, %v199
    %v208 = vcombine.high %v183, %v199
    %v210 = vunpack.c.l.s4 1934713408
    %v211 = vunpack.c.0.s8 %v210
    %v212 = vlaneseq
    %v213 = vshrl.u32 %v212, 7
    %v214 = vsub.s32 %v211, %v213
    %v215 = vrot.slane %v207, %v214
    %v217 = vunpack.c.l.s4 1934713408
    %v218 = vunpack.c.0.s8 %v217
    %v219 = vlaneseq
    %v220 = vshrl.u32 %v219, 7
    %v221 = vsub.s32 %v218, %v220
    %v222 = vrot.slane %v208, %v221
    %v223 = vcombine.low %v190, %v206
    %v224 = vcombine.high %v190, %v206
    %v226 = vunpack.c.l.s4 1934713408
    %v227 = vunpack.c.0.s8 %v226
    %v228 = vlaneseq
    %v229 = vshrl.u32 %v228, 7
    %v230 = vsub.s32 %v227, %v229
    %v231 = vrot.slane %v223, %v230
    %v233 = vunpack.c.l.s4 1934713408
    %v234 = vunpack.c.0.s8 %v233
    %v235 = vlaneseq
    %v236 = vshrl.u32 %v235, 7
    %v237 = vsub.s32 %v234, %v236
    %v238 = vrot.slane %v224, %v237
    %v239 = vcombine.high %v215, 0.0
    %v240 = vcombine.high %v222, 0.0
    %v241 = vcombine.high %v231, 0.0
    %v242 = vcombine.high %v238, 0.0
    %v243 = vcombine.low %v32, %v36
    %v244 = vcombine.high %v32, %v36
    %v246 = vunpack.c.l.s4 1983009808
    %v247 = vunpack.c.0.s8 %v246
    %v248 = vlaneseq
    %v249 = vshrl.u32 %v248, 7
    %v250 = vsub.s32 %v247, %v249
    %v251 = vrot.slane %v243, %v250
    %v253 = vunpack.c.l.s4 1983009808
    %v254 = vunpack.c.0.s8 %v253
    %v255 = vlaneseq
    %v256 = vshrl.u32 %v255, 7
    %v257 = vsub.s32 %v254, %v256
    %v258 = vrot.slane %v244, %v257
    %v259 = vcombine.low %v34, %v38
    %v260 = vcombine.high %v34, %v38
    %v262 = vunpack.c.l.s4 1983009808
    %v263 = vunpack.c.0.s8 %v262
    %v264 = vlaneseq
    %v265 = vshrl.u32 %v264, 7
    %v266 = vsub.s32 %v263, %v265
    %v267 = vrot.slane %v259, %v266
    %v269 = vunpack.c.l.s4 1983009808
    %v270 = vunpack.c.0.s8 %v269
    %v271 = vlaneseq
    %v272 = vshrl.u32 %v271, 7
    %v273 = vsub.s32 %v270, %v272
    %v274 = vrot.slane %v260, %v273
    %v275 = vcombine.low %v251, %v267
    %v276 = vcombine.high %v251, %v267
    %v278 = vunpack.c.l.s4 1934713408
    %v279 = vunpack.c.0.s8 %v278
    %v280 = vlaneseq
    %v281 = vshrl.u32 %v280, 7
    %v282 = vsub.s32 %v279, %v281
    %v283 = vrot.slane %v275, %v282
    %v285 = vunpack.c.l.s4 1934713408
    %v286 = vunpack.c.0.s8 %v285
    %v287 = vlaneseq
    %v288 = vshrl.u32 %v287, 7
    %v289 = vsub.s32 %v286, %v288
    %v290 = vrot.slane %v276, %v289
    %v291 = vcombine.low %v258, %v274
    %v292 = vcombine.high %v258, %v274
    %v294 = vunpack.c.l.s4 1934713408
    %v295 = vunpack.c.0.s8 %v294
    %v296 = vlaneseq
    %v297 = vshrl.u32 %v296, 7
    %v298 = vsub.s32 %v295, %v297
    %v299 = vrot.slane %v291, %v298
    %v301 = vunpack.c.l.s4 1934713408
    %v302 = vunpack.c.0.s8 %v301
    %v303 = vlaneseq
    %v304 = vshrl.u32 %v303, 7
    %v305 = vsub.s32 %v302, %v304
    %v306 = vrot.slane %v292, %v305
    %v307 = vcombine.high %v283, 0.0
    %v308 = vcombine.high %v290, 0.0
    %v309 = vcombine.high %v299, 0.0
    %v310 = vcombine.high %v306, 0.0
    %vm311 = vcmask 125952
    %312 = vst.msk [vmem:[#allocation5] sm:$0xf] %vm311, %v79
    %313 = vst.msk [vmem:[#allocation5 + $0x4] sm:$0xf] %vm311, %v103
    %314 = vst.msk [vmem:[#allocation5 + $0x8] sm:$0xf] %vm311, %v86
    %315 = vst.msk [vmem:[#allocation5 + $0xc] sm:$0xf] %vm311, %v104
    %316 = vst.msk [vmem:[#allocation5 + $0x10] sm:$0xf] %vm311, %v95
    %317 = vst.msk [vmem:[#allocation5 + $0x14] sm:$0xf] %vm311, %v105
    %318 = vst.msk [vmem:[#allocation5 + $0x18] sm:$0xf] %vm311, %v102
    %319 = vst.msk [vmem:[#allocation5 + $0x1c] sm:$0xf] %vm311, %v106
    %320 = vst.msk [vmem:[#allocation5 + $0x20] sm:$0xf] %vm311, %v147
    %321 = vst.msk [vmem:[#allocation5 + $0x24] sm:$0xf] %vm311, %v171
    %322 = vst.msk [vmem:[#allocation5 + $0x28] sm:$0xf] %vm311, %v154
    %323 = vst.msk [vmem:[#allocation5 + $0x2c] sm:$0xf] %vm311, %v172
    %324 = vst.msk [vmem:[#allocation5 + $0x30] sm:$0xf] %vm311, %v163
    %325 = vst.msk [vmem:[#allocation5 + $0x34] sm:$0xf] %vm311, %v173
    %326 = vst.msk [vmem:[#allocation5 + $0x38] sm:$0xf] %vm311, %v170
    %327 = vst.msk [vmem:[#allocation5 + $0x3c] sm:$0xf] %vm311, %v174
    %328 = vst.msk [vmem:[#allocation5 + $0x40] sm:$0xf] %vm311, %v215
    %329 = vst.msk [vmem:[#allocation5 + $0x44] sm:$0xf] %vm311, %v239
    %330 = vst.msk [vmem:[#allocation5 + $0x48] sm:$0xf] %vm311, %v222
    %331 = vst.msk [vmem:[#allocation5 + $0x4c] sm:$0xf] %vm311, %v240
    %332 = vst.msk [vmem:[#allocation5 + $0x50] sm:$0xf] %vm311, %v231
    %333 = vst.msk [vmem:[#allocation5 + $0x54] sm:$0xf] %vm311, %v241
    %334 = vst.msk [vmem:[#allocation5 + $0x58] sm:$0xf] %vm311, %v238
    %335 = vst.msk [vmem:[#allocation5 + $0x5c] sm:$0xf] %vm311, %v242
    %336 = vst.msk [vmem:[#allocation5 + $0x60] sm:$0xf] %vm311, %v283
    %337 = vst.msk [vmem:[#allocation5 + $0x64] sm:$0xf] %vm311, %v307
    %338 = vst.msk [vmem:[#allocation5 + $0x68] sm:$0xf] %vm311, %v290
    %339 = vst.msk [vmem:[#allocation5 + $0x6c] sm:$0xf] %vm311, %v308
    %340 = vst.msk [vmem:[#allocation5 + $0x70] sm:$0xf] %vm311, %v299
    %341 = vst.msk [vmem:[#allocation5 + $0x74] sm:$0xf] %vm311, %v309
    %342 = vst.msk [vmem:[#allocation5 + $0x78] sm:$0xf] %vm311, %v306
    %343 = vst.msk [vmem:[#allocation5 + $0x7c] sm:$0xf] %vm311, %v310
    // Predicated region
    $region10: #{tpu_custom_call.1} parent=1 // pred_check
      _
    $region11: #{tpu_custom_call.1} parent=1 // pred_check_branch
      %345 = sbr.rel (0) target = $region13
    $region12: #{tpu_custom_call.1} parent=1 // pred_region
      %s347 = ssub.s32 2048, 2048
      %348 = vsyncadd [#allocation4], %s347
      %s349 = sshll.u32 [#allocation5], 4
      %s350 = int_to_ptr.vmem [resolvable:$true] %s349
      %355 = dma.vmem_to_hbm [thread:$0]  %s350, 2048, %s1, [#allocation4], 64, 64, 4
    $region13: #{tpu_custom_call.1} parent=1 // pred_fallthru
      _
    // Predicated region
    $region14: #{tpu_custom_call.1} parent=1 // pred_check
      _
    $region15: #{tpu_custom_call.1} parent=1 // pred_check_branch
      %357 = sbr.rel (0) target = $region17
    $region16: #{tpu_custom_call.1} parent=1 // pred_region
      %358 = dma.done [#allocation4], 2048
    $region17: #{tpu_custom_call.1} parent=1 // pred_fallthru
      _
    %359 = vsyncpa [#allocation3], 1
    %360 = vsyncpa [#allocation4], 1

</llo_original>
